<compile_context>
chip_gen: v7x
topology: tpu7x:2x2x1
jax: 0.10.0
libtpu: 0.0.40
codegen_flags: <defaults>
</compile_context>

<pallas_src>
import functools

import jax
import jax.numpy as jnp
from jax.experimental import pallas as pl
from jax.experimental.pallas import tpu as pltpu


def _round_up(x, m):
    return ((x + m - 1) // m) * m


def _pick_tile(dim, cap):
    """Largest lane-aligned (multiple-of-128) tile <= cap.

    Prefers an exact divisor of the 128-padded dim so no zero-padded weight
    bytes are streamed from HBM, but will not shrink below cap/2 to get one
    (tiny tiles would re-expose the fixed per-grid-step overhead).
    """
    dim128 = _round_up(dim, 128)
    cap = max(128, cap - cap % 128)
    if dim128 <= cap:
        return dim128
    t = cap
    while t >= max(128, cap // 2):
        if dim128 % t == 0:
            return t
        t -= 128
    return cap


def _linear_kernel(x_ref, w_ref, b_ref, o_ref, acc_ref, *, tk, tn, apply_relu):
    """One (n, k) grid step of a tiled x @ W + b (+ ReLU).

    x (B, K_pad) and bias (1, N_pad) are fully VMEM-resident (constant
    index_map); only the (tk, tn) weight tile is streamed from HBM each step.
    """
    n = pl.program_id(0)
    k = pl.program_id(1)

    @pl.when(k == 0)
    def _():
        acc_ref[...] = jnp.zeros_like(acc_ref)

    x_blk = x_ref[:, pl.ds(pl.multiple_of(k * tk, 128), tk)]
    acc_ref[...] += jnp.dot(x_blk, w_ref[...], preferred_element_type=jnp.float32)

    @pl.when(k == pl.num_programs(1) - 1)
    def _():
        bias = b_ref[:, pl.ds(pl.multiple_of(n * tn, 128), tn)]
        out = acc_ref[...] + bias
        if apply_relu:
            out = jnp.maximum(out, 0.0)
        o_ref[...] = out.astype(o_ref.dtype)


def _pallas_linear(x, w, b, *, apply_relu, out_dtype, tile_n=1024, tile_k=2048):
    """Tiled Linear: x (B, K) @ w (K, N) + b (N,), optional ReLU.

    x/w are expected in bf16 (weight-bandwidth-bound regime); accumulation is
    f32.  Weights are pre-tiled in HBM and streamed one contiguous (tk, tn)
    block per grid step by the BlockSpec pipeline (double-buffered DMA).
    """
    B, K = x.shape
    Kw, N = w.shape
    assert K == Kw, (K, Kw)

    tk = _pick_tile(K, tile_k)
    tn = _pick_tile(N, tile_n)
    k_pad = _round_up(K, tk)
    n_pad = _round_up(N, tn)

    if k_pad != K:
        x = jnp.pad(x, ((0, 0), (0, k_pad - K)))
        w = jnp.pad(w, ((0, k_pad - K), (0, 0)))
    if n_pad != N:
        w = jnp.pad(w, ((0, 0), (0, n_pad - N)))
        b = jnp.pad(b, (0, n_pad - N))
    b2d = b.reshape(1, n_pad).astype(jnp.float32)

    kb, nb = k_pad // tk, n_pad // tn

    # Pre-tile weights once (weights are constants in a real model) so each
    # grid step's weight DMA is one contiguous (tk, tn) slab.
    w_tiled = w.reshape(kb, tk, nb, tn).transpose(0, 2, 1, 3)  # (kb, nb, tk, tn)

    grid = (nb, kb)  # reduction axis (K) last, by convention

    out = pl.pallas_call(
        functools.partial(_linear_kernel, tk=tk, tn=tn, apply_relu=apply_relu),
        out_shape=jax.ShapeDtypeStruct((B, n_pad), out_dtype),
        grid_spec=pltpu.PrefetchScalarGridSpec(
            num_scalar_prefetch=0,
            grid=grid,
            in_specs=[
                # activations: fully VMEM-resident, fetched once
                pl.BlockSpec((B, k_pad), lambda n, k: (0, 0)),
                # weights: streamed, one contiguous pre-tiled block per step
                pl.BlockSpec((None, None, tk, tn), lambda n, k: (k, n, 0, 0)),
                # bias: fully VMEM-resident
                pl.BlockSpec((1, n_pad), lambda n, k: (0, 0)),
            ],
            out_specs=pl.BlockSpec((B, tn), lambda n, k: (0, n)),
            scratch_shapes=[pltpu.VMEM((B, tn), jnp.float32)],  # f32 accumulator
        ),
        compiler_params=pltpu.CompilerParams(
            # N tiles are independent -> parallel (keeps both v7x TCs busy when
            # nb >= 2); K is the accumulated reduction axis -> arbitrary.
            dimension_semantics=("parallel", "arbitrary"),
            # Above the default scoped limit on all generations, below v7x's
            # 64 MiB physical VMEM.
            vmem_limit_bytes=48 * 1024 * 1024,
        ),
    )(x, w_tiled, b2d)

    if n_pad != N:
        out = out[:, :N]
    return out


def classifier_forward(x, params, *, tile_n=1024, tile_k=2048):
    """x: (B, C, H, W) float32. params: dict of w1,b1,w2,b2,w3,b3 (f32)."""
    B = x.shape[0]
    # torch.flatten(x, start_dim=1); cast to bf16 (workload is weight-BW bound,
    # MXU is bf16-native, accumulation stays f32 inside the kernel).
    x2d = x.reshape(B, -1).astype(jnp.bfloat16)

    # TODO(synk): next ~2x lever is weight quantization (int8/int4 on v5e/v6e,
    # fp8-e4m3 on v7x) fused into the finalize; kept bf16 to stay chip-agnostic.
    w1 = params["w1"].astype(jnp.bfloat16)
    w2 = params["w2"].astype(jnp.bfloat16)
    w3 = params["w3"].astype(jnp.bfloat16)

    h = _pallas_linear(x2d, w1, params["b1"], apply_relu=True,
                       out_dtype=jnp.bfloat16, tile_n=tile_n, tile_k=tile_k)
    # TODO(synk): Dropout(p=0.5) is identity in eval mode; training-mode RNG
    # masking (pltpu.prng_*) is not emitted.
    h = _pallas_linear(h, w2, params["b2"], apply_relu=True,
                       out_dtype=jnp.bfloat16, tile_n=tile_n, tile_k=tile_k)
    out = _pallas_linear(h, w3, params["b3"], apply_relu=False,
                         out_dtype=jnp.float32, tile_n=tile_n, tile_k=tile_k)
    return out


def init_params(key, in_features, middle_features, out_features):
    """Deterministic, PyTorch-Linear-style uniform init (synthetic weights)."""
    ks = jax.random.split(key, 6)

    def linear_init(kw, kb, fan_in, fan_out):
        bound = 1.0 / jnp.sqrt(jnp.float32(fan_in))
        # stored as (in, out) => kernel computes x @ W
        w = jax.random.uniform(kw, (fan_in, fan_out), jnp.float32, -bound, bound)
        b = jax.random.uniform(kb, (fan_out,), jnp.float32, -bound, bound)
        return w, b

    w1, b1 = linear_init(ks[0], ks[1], in_features, middle_features)
    w2, b2 = linear_init(ks[2], ks[3], middle_features, middle_features)
    w3, b3 = linear_init(ks[4], ks[5], middle_features, out_features)
    return {"w1": w1, "b1": b1, "w2": w2, "b2": b2, "w3": w3, "b3": b3}


def reference_forward(x, params):
    """Pure-JAX f32 reference of the PyTorch forward (eval mode)."""
    B = x.shape[0]
    h = x.reshape(B, -1)
    h = jnp.maximum(h @ params["w1"] + params["b1"], 0.0)
    h = jnp.maximum(h @ params["w2"] + params["b2"], 0.0)
    return h @ params["w3"] + params["b3"]


if __name__ == "__main__":
    # Small shapes consistent with the module: x (B, C, H, W) flattened to
    # in_features = C*H*W = 1024; out_features = 10 exercises N padding.
    B, C, Himg, Wimg = 2, 4, 16, 16          # in_features = 1024
    in_features = C * Himg * Wimg
    middle_features = 256
    out_features = 10

    key = jax.random.PRNGKey(0)
    k_x, k_p = jax.random.split(key)
    x = jax.random.normal(k_x, (B, C, Himg, Wimg), jnp.float32)
    params = init_params(k_p, in_features, middle_features, out_features)

    ref = reference_forward(x, params)

    # 1) Production tile sizes (single block per layer at these small shapes).
    out = jax.block_until_ready(classifier_forward(x, params))
    assert out.shape == (B, out_features)
    assert jnp.allclose(out, ref, atol=2.5e-2, rtol=2.5e-2), "mismatch (default tiles)"

    # 2) Small tiles to exercise the multi-step K reduction, multi-tile N grid,
    #    resident-x/bias slicing and the pre-tiled weight path.
    out_small = jax.block_until_ready(
        classifier_forward(x, params, tile_n=128, tile_k=256))
    assert out_small.shape == (B, out_features)
    assert jnp.allclose(out_small, ref, atol=2.5e-2, rtol=2.5e-2), "mismatch (small tiles)"

    print("KERNEL_OK")
</pallas_src>

<mosaic_0001>
module attributes {stable_mosaic.version = 11 : i64} {
  func.func @_linear_kernel(%arg0: i32, %arg1: i32, %arg2: memref<2x1024xbf16, #tpu.memory_space<vmem>>, %arg3: memref<1x1x1024x256xbf16, #tpu.memory_space<vmem>>, %arg4: memref<1x256xf32, #tpu.memory_space<vmem>>, %arg5: memref<2x256xbf16, #tpu.memory_space<vmem>>, %arg6: memref<2x256xf32, #tpu.memory_space<vmem>>) attributes {dimension_semantics = [#tpu.dimension_semantics<parallel>, #tpu.dimension_semantics<arbitrary>], iteration_bounds = array<i64: 1, 1>, scalar_prefetch = 0 : i64, scratch_operands = 1 : i64, tpu.core_type = #tpu.core_type<tc>, window_params = [{pipeline_mode = #tpu.pipeline_mode<synchronous>, transform_indices = @transform_0, window_bounds = array<i64: 2, 1024>}, {transform_indices = @transform_1, window_bounds = array<i64: 1, 1, 1024, 256>}, {pipeline_mode = #tpu.pipeline_mode<synchronous>, transform_indices = @transform_2, window_bounds = array<i64: 1, 256>}, {transform_indices = @transform_3, window_bounds = array<i64: 2, 256>}]} {
    %c0_i32 = arith.constant 0 : i32
    %0 = arith.cmpi eq, %arg1, %c0_i32 : i32
    %1 = arith.extui %0 : i1 to i32
    %c0_i32_0 = arith.constant 0 : i32
    %2 = arith.cmpi ne, %1, %c0_i32_0 : i32
    scf.if %2 {
      %cst_11 = arith.constant 0.000000e+00 : f32
      %16 = vector.broadcast %cst_11 : f32 to vector<2x256xf32>
      %c0_12 = arith.constant 0 : index
      %c0_13 = arith.constant 0 : index
      %17 = vector.load %arg6[%c0_12, %c0_13] : memref<2x256xf32, #tpu.memory_space<vmem>>, vector<2x256xf32>
      tpu.vector_store %arg6[%c0_12, %c0_13], %16 {strides = array<i32>} : memref<2x256xf32, #tpu.memory_space<vmem>>, vector<2x256xf32>,
    } else {
    }
    %c1024_i32 = arith.constant 1024 : i32
    %3 = arith.muli %arg1, %c1024_i32 : i32
    %4 = tpu.assume_multiple %3, 128 : i32
    %c0 = arith.constant 0 : index
    %5 = arith.index_cast %4 : i32 to index
    %6 = vector.load %arg2[%c0, %5] : memref<2x1024xbf16, #tpu.memory_space<vmem>>, vector<2x1024xbf16>
    %c0_1 = arith.constant 0 : index
    %c0_2 = arith.constant 0 : index
    %7 = vector.load %arg6[%c0_1, %c0_2] : memref<2x256xf32, #tpu.memory_space<vmem>>, vector<2x256xf32>
    %c0_3 = arith.constant 0 : index
    %c0_4 = arith.constant 0 : index
    %c0_5 = arith.constant 0 : index
    %c0_6 = arith.constant 0 : index
    %8 = vector.load %arg3[%c0_3, %c0_4, %c0_5, %c0_6] : memref<1x1x1024x256xbf16, #tpu.memory_space<vmem>>, vector<1x1x1024x256xbf16>
    %9 = vector.shape_cast %8 : vector<1x1x1024x256xbf16> to vector<1024x256xbf16>
    %cst = arith.constant dense<0.000000e+00> : vector<2x256xf32>
    %10 = tpu.matmul %6, %9, %cst {dimension_numbers = #tpu.dot_dimension_numbers<[1], [0], [0], [1], [0, 0, 1, 1], [], []>} : vector<2x1024xbf16>, vector<1024x256xbf16>, vector<2x256xf32> -> vector<2x256xf32>
    %11 = arith.addf %7, %10 : vector<2x256xf32>
    %c0_7 = arith.constant 0 : index
    %c0_8 = arith.constant 0 : index
    %12 = vector.load %arg6[%c0_7, %c0_8] : memref<2x256xf32, #tpu.memory_space<vmem>>, vector<2x256xf32>
    tpu.vector_store %arg6[%c0_7, %c0_8], %11 {strides = array<i32>} : memref<2x256xf32, #tpu.memory_space<vmem>>, vector<2x256xf32>,
    %c0_i32_9 = arith.constant 0 : i32
    %13 = arith.cmpi eq, %arg1, %c0_i32_9 : i32
    %14 = arith.extui %13 : i1 to i32
    %c0_i32_10 = arith.constant 0 : i32
    %15 = arith.cmpi ne, %14, %c0_i32_10 : i32
    scf.if %15 {
      %c256_i32 = arith.constant 256 : i32
      %16 = arith.muli %arg0, %c256_i32 : i32
      %17 = tpu.assume_multiple %16, 128 : i32
      %c0_11 = arith.constant 0 : index
      %18 = arith.index_cast %17 : i32 to index
      %19 = vector.load %arg4[%c0_11, %18] : memref<1x256xf32, #tpu.memory_space<vmem>>, vector<1x256xf32>
      %c0_12 = arith.constant 0 : index
      %c0_13 = arith.constant 0 : index
      %20 = vector.load %arg6[%c0_12, %c0_13] : memref<2x256xf32, #tpu.memory_space<vmem>>, vector<2x256xf32>
      %21 = vector.broadcast %19 : vector<1x256xf32> to vector<2x256xf32>
      %22 = arith.addf %20, %21 : vector<2x256xf32>
      %cst_14 = arith.constant 0.000000e+00 : f32
      %23 = vector.broadcast %cst_14 : f32 to vector<2x256xf32>
      %24 = arith.maximumf %22, %23 : vector<2x256xf32>
      %25 = arith.truncf %24 : vector<2x256xf32> to vector<2x256xbf16>
      %c0_15 = arith.constant 0 : index
      %c0_16 = arith.constant 0 : index
      %26 = vector.load %arg5[%c0_15, %c0_16] : memref<2x256xbf16, #tpu.memory_space<vmem>>, vector<2x256xbf16>
      tpu.vector_store %arg5[%c0_15, %c0_16], %25 {strides = array<i32>} : memref<2x256xbf16, #tpu.memory_space<vmem>>, vector<2x256xbf16>,
    } else {
    }
    return
  }
  func.func @transform_0(%arg0: i32, %arg1: i32) -> (i32, i32) {
    %c0_i32 = arith.constant 0 : i32
    %c0_i32_0 = arith.constant 0 : i32
    %c0_i32_1 = arith.constant 0 : i32
    return %c0_i32, %c0_i32_0 : i32, i32
  }
  func.func @transform_1(%arg0: i32, %arg1: i32) -> (i32, i32, i32, i32) {
    %c0_i32 = arith.constant 0 : i32
    %c0_i32_0 = arith.constant 0 : i32
    %c0_i32_1 = arith.constant 0 : i32
    return %arg1, %arg0, %c0_i32, %c0_i32_0 : i32, i32, i32, i32
  }
  func.func @transform_2(%arg0: i32, %arg1: i32) -> (i32, i32) {
    %c0_i32 = arith.constant 0 : i32
    %c0_i32_0 = arith.constant 0 : i32
    %c0_i32_1 = arith.constant 0 : i32
    return %c0_i32, %c0_i32_0 : i32, i32
  }
  func.func @transform_3(%arg0: i32, %arg1: i32) -> (i32, i32) {
    %c0_i32 = arith.constant 0 : i32
    %c0_i32_0 = arith.constant 0 : i32
    return %c0_i32, %arg0 : i32, i32
  }
}

</mosaic_0001>

<llo_original>
// kernel: tpu_custom_call.1
$region0: #{tpu_custom_call.1}
  #allocation0 [shape = 'u32[]', space=smem, size = 0x4, offset = 0x4, fixed_abs, tag = 'smem constant byte address 0x4 - core index']
  #allocation1 [shape = 'u32[144,128]{1,0:T(1,128)}', space=vmem, size = 0x12000, scoped, tag = 'internal scratch']
  #allocation2 [shape = 'f32[2,256]{1,0:T(2,128)}', space=vmem, size = 0x800, scoped, tag = 'scratch operand']
  %s0 = inlined_call_operand.hbm [shape: bf16[2,1024], index: 0, kind: input, shape index: {}]
  %s1 = inlined_call_operand.hbm [shape: bf16[1,1,1024,256], index: 1, kind: input, shape index: {}]
  %s2 = inlined_call_operand.vmem [shape: f32[1,256], index: 2, kind: input, shape index: {}]
  %s3 = inlined_call_operand.hbm [shape: bf16[2,256], index: 3, kind: output, shape index: {}]
  %s4 = sld [smem:[#allocation0]]
  $region38: #{tpu_custom_call.1} parent=0
    _
  %s6 = ssub.s32 1, %s4
  %s7 = scalar_select 0, %s6, %s4
  $region1: #{tpu_custom_call.1} parent=0
    #allocation3 [shape = 'u8[4096]{0}', space=vmem, size = 0x1000, scoped, tag = 'input window, operand 0, single buffered']
    #allocation4 [shape = 's32[1]{0}', space=sflag, size = 0x4, scoped, tag = 'scoped memory for tpu_custom_call.1']
    #allocation5 [shape = 's32[1]{0}', space=sflag, size = 0x4, scoped, tag = 'scoped memory for tpu_custom_call.1']
    #allocation6 [shape = 'u8[524288]{0}', space=vmem, size = 0x80000, scoped, tag = 'input window, operand 1, single buffered']
    #allocation7 [shape = 's32[1]{0}', space=sflag, size = 0x4, scoped, tag = 'scoped memory for tpu_custom_call.1']
    #allocation8 [shape = 'u8[1024]{0}', space=vmem, size = 0x400, scoped, tag = 'output window, operand 0, single buffered']
    %8 = vsyncpa [#allocation4], 0
    %9 = vsyncpa [#allocation7], 0
    %10 = vsyncpa [#allocation5], 0
    // Predicated region
    $region2: #{tpu_custom_call.1} parent=1 // pred_check
      _
    $region3: #{tpu_custom_call.1} parent=1 // pred_check_branch
      %12 = sbr.rel (0) target = $region5
    $region4: #{tpu_custom_call.1} parent=1 // pred_region
      %s14 = ssub.s32 128, 128
      %15 = vsyncadd [#allocation4], %s14
      %s17 = sshll.u32 [#allocation3], 4
      %s18 = int_to_ptr.vmem [resolvable:$true] %s17
      %20 = dma.hbm_to_vmem [thread:$0]  %s0, 128, %s18, [#allocation4]
    $region5: #{tpu_custom_call.1} parent=1 // pred_fallthru
      _
    // Predicated region
    $region6: #{tpu_custom_call.1} parent=1 // pred_check
      _
    $region7: #{tpu_custom_call.1} parent=1 // pred_check_branch
      %22 = sbr.rel (0) target = $region9
    $region8: #{tpu_custom_call.1} parent=1 // pred_region
      %s24 = ssub.s32 16384, 16384
      %25 = vsyncadd [#allocation7], %s24
      %s26 = sshll.u32 [#allocation6], 4
      %s27 = int_to_ptr.vmem [resolvable:$true] %s26
      %32 = dma.hbm_to_vmem [thread:$0]  %s1, 16384, %s27, [#allocation7], 128, 128, 8
    $region9: #{tpu_custom_call.1} parent=1 // pred_fallthru
      _
    // Predicated region
    $region10: #{tpu_custom_call.1} parent=1 // pred_check
      _
    $region11: #{tpu_custom_call.1} parent=1 // pred_check_branch
      %34 = sbr.rel (0) target = $region13
    $region12: #{tpu_custom_call.1} parent=1 // pred_region
      _
    $region13: #{tpu_custom_call.1} parent=1 // pred_fallthru
      _
    // Predicated region
    $region14: #{tpu_custom_call.1} parent=1 // pred_check
      _
    $region15: #{tpu_custom_call.1} parent=1 // pred_check_branch
      %36 = sbr.rel (0) target = $region17
    $region16: #{tpu_custom_call.1} parent=1 // pred_region
      %37 = dma.done [#allocation4], 128
    $region17: #{tpu_custom_call.1} parent=1 // pred_fallthru
      _
    // Predicated region
    $region18: #{tpu_custom_call.1} parent=1 // pred_check
      _
    $region19: #{tpu_custom_call.1} parent=1 // pred_check_branch
      %39 = sbr.rel (0) target = $region21
    $region20: #{tpu_custom_call.1} parent=1 // pred_region
      %40 = dma.done [#allocation7], 16384
    $region21: #{tpu_custom_call.1} parent=1 // pred_fallthru
      _
    %p41 = scmp.eq.s32.totalorder 0, 0
    // Predicated region
    $region22: #{tpu_custom_call.1} parent=1 // pred_check
      %p42 = pneg %p41
    $region23: #{tpu_custom_call.1} parent=1 // pred_check_branch
      %44 = sbr.rel (%p42) target = $region25
    $region24: #{tpu_custom_call.1} parent=1 // pred_region
      %45 = vst [vmem:[#allocation2] sm:$0xf] 0.0
    $region25: #{tpu_custom_call.1} parent=1 // pred_fallthru
      _
    %s46 = smul.u32 0, 1024
    %s47 = sshra.s32 %s46, 7
    %s48 = sand.u32 %s46, 127
    %s49 = scalar_lea.vmem [#allocation3], %s47
    %v50 = vld [vmem:[%s49] sm:$0xff]
    %v51 = vld [vmem:[#allocation2] sm:$0xf]
    %v52 = vld [vmem:[#allocation6] sm:$0xff]
    %v53 = vld [vmem:[#allocation6 + $0x8] sm:$0xff]
    %v54 = vld [vmem:[#allocation6 + $0x10] sm:$0xff]
    %v55 = vld [vmem:[#allocation6 + $0x18] sm:$0xff]
    %v56 = vld [vmem:[#allocation6 + $0x20] sm:$0xff]
    %v57 = vld [vmem:[#allocation6 + $0x28] sm:$0xff]
    %v58 = vld [vmem:[#allocation6 + $0x30] sm:$0xff]
    %v59 = vld [vmem:[#allocation6 + $0x38] sm:$0xff]
    %v60 = vld [vmem:[#allocation6 + $0x40] sm:$0xff]
    %v61 = vld [vmem:[#allocation6 + $0x48] sm:$0xff]
    %v62 = vld [vmem:[#allocation6 + $0x50] sm:$0xff]
    %v63 = vld [vmem:[#allocation6 + $0x58] sm:$0xff]
    %v64 = vld [vmem:[#allocation6 + $0x60] sm:$0xff]
    %v65 = vld [vmem:[#allocation6 + $0x68] sm:$0xff]
    %v66 = vld [vmem:[#allocation6 + $0x70] sm:$0xff]
    %v67 = vld [vmem:[#allocation6 + $0x78] sm:$0xff]
    %v68 = vld [vmem:[#allocation6 + $0x80] sm:$0xff]
    %v69 = vld [vmem:[#allocation6 + $0x88] sm:$0xff]
    %v70 = vld [vmem:[#allocation6 + $0x90] sm:$0xff]
    %v71 = vld [vmem:[#allocation6 + $0x98] sm:$0xff]
    %v72 = vld [vmem:[#allocation6 + $0xa0] sm:$0xff]
    %v73 = vld [vmem:[#allocation6 + $0xa8] sm:$0xff]
    %v74 = vld [vmem:[#allocation6 + $0xb0] sm:$0xff]
    %v75 = vld [vmem:[#allocation6 + $0xb8] sm:$0xff]
    %v76 = vld [vmem:[#allocation6 + $0xc0] sm:$0xff]
    %v77 = vld [vmem:[#allocation6 + $0xc8] sm:$0xff]
    %v78 = vld [vmem:[#allocation6 + $0xd0] sm:$0xff]
    %v79 = vld [vmem:[#allocation6 + $0xd8] sm:$0xff]
    %v80 = vld [vmem:[#allocation6 + $0xe0] sm:$0xff]
    %v81 = vld [vmem:[#allocation6 + $0xe8] sm:$0xff]
    %v82 = vld [vmem:[#allocation6 + $0xf0] sm:$0xff]
    %v83 = vld [vmem:[#allocation6 + $0xf8] sm:$0xff]
    %v84 = vld [vmem:[#allocation6 + $0x100] sm:$0xff]
    %v85 = vld [vmem:[#allocation6 + $0x108] sm:$0xff]
    %v86 = vld [vmem:[#allocation6 + $0x110] sm:$0xff]
    %v87 = vld [vmem:[#allocation6 + $0x118] sm:$0xff]
    %v88 = vld [vmem:[#allocation6 + $0x120] sm:$0xff]
    %v89 = vld [vmem:[#allocation6 + $0x128] sm:$0xff]
    %v90 = vld [vmem:[#allocation6 + $0x130] sm:$0xff]
    %v91 = vld [vmem:[#allocation6 + $0x138] sm:$0xff]
    %v92 = vld [vmem:[#allocation6 + $0x140] sm:$0xff]
    %v93 = vld [vmem:[#allocation6 + $0x148] sm:$0xff]
    %v94 = vld [vmem:[#allocation6 + $0x150] sm:$0xff]
    %v95 = vld [vmem:[#allocation6 + $0x158] sm:$0xff]
    %v96 = vld [vmem:[#allocation6 + $0x160] sm:$0xff]
    %v97 = vld [vmem:[#allocation6 + $0x168] sm:$0xff]
    %v98 = vld [vmem:[#allocation6 + $0x170] sm:$0xff]
    %v99 = vld [vmem:[#allocation6 + $0x178] sm:$0xff]
    %v100 = vld [vmem:[#allocation6 + $0x180] sm:$0xff]
    %v101 = vld [vmem:[#allocation6 + $0x188] sm:$0xff]
    %v102 = vld [vmem:[#allocation6 + $0x190] sm:$0xff]
    %v103 = vld [vmem:[#allocation6 + $0x198] sm:$0xff]
    %v104 = vld [vmem:[#allocation6 + $0x1a0] sm:$0xff]
    %v105 = vld [vmem:[#allocation6 + $0x1a8] sm:$0xff]
    %v106 = vld [vmem:[#allocation6 + $0x1b0] sm:$0xff]
    %v107 = vld [vmem:[#allocation6 + $0x1b8] sm:$0xff]
    %v108 = vld [vmem:[#allocation6 + $0x1c0] sm:$0xff]
    %v109 = vld [vmem:[#allocation6 + $0x1c8] sm:$0xff]
    %v110 = vld [vmem:[#allocation6 + $0x1d0] sm:$0xff]
    %v111 = vld [vmem:[#allocation6 + $0x1d8] sm:$0xff]
    %v112 = vld [vmem:[#allocation6 + $0x1e0] sm:$0xff]
    %v113 = vld [vmem:[#allocation6 + $0x1e8] sm:$0xff]
    %v114 = vld [vmem:[#allocation6 + $0x1f0] sm:$0xff]
    %v115 = vld [vmem:[#allocation6 + $0x1f8] sm:$0xff]
    %v116 = vld [vmem:[#allocation6 + $0x200] sm:$0xff]
    %v117 = vld [vmem:[#allocation6 + $0x208] sm:$0xff]
    %v118 = vld [vmem:[#allocation6 + $0x210] sm:$0xff]
    %v119 = vld [vmem:[#allocation6 + $0x218] sm:$0xff]
    %v120 = vld [vmem:[#allocation6 + $0x220] sm:$0xff]
    %v121 = vld [vmem:[#allocation6 + $0x228] sm:$0xff]
    %v122 = vld [vmem:[#allocation6 + $0x230] sm:$0xff]
    %v123 = vld [vmem:[#allocation6 + $0x238] sm:$0xff]
    %v124 = vld [vmem:[#allocation6 + $0x240] sm:$0xff]
    %v125 = vld [vmem:[#allocation6 + $0x248] sm:$0xff]
    %v126 = vld [vmem:[#allocation6 + $0x250] sm:$0xff]
    %v127 = vld [vmem:[#allocation6 + $0x258] sm:$0xff]
    %v128 = vld [vmem:[#allocation6 + $0x260] sm:$0xff]
    %v129 = vld [vmem:[#allocation6 + $0x268] sm:$0xff]
    %v130 = vld [vmem:[#allocation6 + $0x270] sm:$0xff]
    %v131 = vld [vmem:[#allocation6 + $0x278] sm:$0xff]
    %v132 = vld [vmem:[#allocation6 + $0x280] sm:$0xff]
    %v133 = vld [vmem:[#allocation6 + $0x288] sm:$0xff]
    %v134 = vld [vmem:[#allocation6 + $0x290] sm:$0xff]
    %v135 = vld [vmem:[#allocation6 + $0x298] sm:$0xff]
    %v136 = vld [vmem:[#allocation6 + $0x2a0] sm:$0xff]
    %v137 = vld [vmem:[#allocation6 + $0x2a8] sm:$0xff]
    %v138 = vld [vmem:[#allocation6 + $0x2b0] sm:$0xff]
    %v139 = vld [vmem:[#allocation6 + $0x2b8] sm:$0xff]
    %v140 = vld [vmem:[#allocation6 + $0x2c0] sm:$0xff]
    %v141 = vld [vmem:[#allocation6 + $0x2c8] sm:$0xff]
    %v142 = vld [vmem:[#allocation6 + $0x2d0] sm:$0xff]
    %v143 = vld [vmem:[#allocation6 + $0x2d8] sm:$0xff]
    %v144 = vld [vmem:[#allocation6 + $0x2e0] sm:$0xff]
    %v145 = vld [vmem:[#allocation6 + $0x2e8] sm:$0xff]
    %v146 = vld [vmem:[#allocation6 + $0x2f0] sm:$0xff]
    %v147 = vld [vmem:[#allocation6 + $0x2f8] sm:$0xff]
    %v148 = vld [vmem:[#allocation6 + $0x300] sm:$0xff]
    %v149 = vld [vmem:[#allocation6 + $0x308] sm:$0xff]
    %v150 = vld [vmem:[#allocation6 + $0x310] sm:$0xff]
    %v151 = vld [vmem:[#allocation6 + $0x318] sm:$0xff]
    %v152 = vld [vmem:[#allocation6 + $0x320] sm:$0xff]
    %v153 = vld [vmem:[#allocation6 + $0x328] sm:$0xff]
    %v154 = vld [vmem:[#allocation6 + $0x330] sm:$0xff]
    %v155 = vld [vmem:[#allocation6 + $0x338] sm:$0xff]
    %v156 = vld [vmem:[#allocation6 + $0x340] sm:$0xff]
    %v157 = vld [vmem:[#allocation6 + $0x348] sm:$0xff]
    %v158 = vld [vmem:[#allocation6 + $0x350] sm:$0xff]
    %v159 = vld [vmem:[#allocation6 + $0x358] sm:$0xff]
    %v160 = vld [vmem:[#allocation6 + $0x360] sm:$0xff]
    %v161 = vld [vmem:[#allocation6 + $0x368] sm:$0xff]
    %v162 = vld [vmem:[#allocation6 + $0x370] sm:$0xff]
    %v163 = vld [vmem:[#allocation6 + $0x378] sm:$0xff]
    %v164 = vld [vmem:[#allocation6 + $0x380] sm:$0xff]
    %v165 = vld [vmem:[#allocation6 + $0x388] sm:$0xff]
    %v166 = vld [vmem:[#allocation6 + $0x390] sm:$0xff]
    %v167 = vld [vmem:[#allocation6 + $0x398] sm:$0xff]
    %v168 = vld [vmem:[#allocation6 + $0x3a0] sm:$0xff]
    %v169 = vld [vmem:[#allocation6 + $0x3a8] sm:$0xff]
    %v170 = vld [vmem:[#allocation6 + $0x3b0] sm:$0xff]
    %v171 = vld [vmem:[#allocation6 + $0x3b8] sm:$0xff]
    %v172 = vld [vmem:[#allocation6 + $0x3c0] sm:$0xff]
    %v173 = vld [vmem:[#allocation6 + $0x3c8] sm:$0xff]
    %v174 = vld [vmem:[#allocation6 + $0x3d0] sm:$0xff]
    %v175 = vld [vmem:[#allocation6 + $0x3d8] sm:$0xff]
    %v176 = vld [vmem:[#allocation6 + $0x3e0] sm:$0xff]
    %v177 = vld [vmem:[#allocation6 + $0x3e8] sm:$0xff]
    %v178 = vld [vmem:[#allocation6 + $0x3f0] sm:$0xff]
    %v179 = vld [vmem:[#allocation6 + $0x3f8] sm:$0xff]
    %v181 = vcombine.high %v50, %v50
    %v183 = vunpack.c.l.s4 1966171168
    %v184 = vunpack.c.0.s8 %v183
    %v185 = vlaneseq
    %v186 = vshrl.u32 %v185, 7
    %v187 = vsub.s32 %v184, %v186
    %v188 = vrot.slane %v50, %v187
    %v190 = vunpack.c.l.s4 1966171168
    %v191 = vunpack.c.0.s8 %v190
    %v192 = vlaneseq
    %v193 = vshrl.u32 %v192, 7
    %v194 = vsub.s32 %v191, %v193
    %v195 = vrot.slane %v181, %v194
    %v196 = vcombine.high %v188, %v188
    %v197 = vcombine.high %v195, %v195
    %v199 = vunpack.c.l.s4 1966171168
    %v200 = vunpack.c.0.s8 %v199
    %v201 = vlaneseq
    %v202 = vshrl.u32 %v201, 7
    %v203 = vsub.s32 %v200, %v202
    %v204 = vrot.slane %v188, %v203
    %v206 = vunpack.c.l.s4 1966171168
    %v207 = vunpack.c.0.s8 %v206
    %v208 = vlaneseq
    %v209 = vshrl.u32 %v208, 7
    %v210 = vsub.s32 %v207, %v209
    %v211 = vrot.slane %v195, %v210
    %v213 = vunpack.c.l.s4 1966171168
    %v214 = vunpack.c.0.s8 %v213
    %v215 = vlaneseq
    %v216 = vshrl.u32 %v215, 7
    %v217 = vsub.s32 %v214, %v216
    %v218 = vrot.slane %v196, %v217
    %v220 = vunpack.c.l.s4 1966171168
    %v221 = vunpack.c.0.s8 %v220
    %v222 = vlaneseq
    %v223 = vshrl.u32 %v222, 7
    %v224 = vsub.s32 %v221, %v223
    %v225 = vrot.slane %v197, %v224
    %v226 = vcombine.high %v204, %v204
    %v227 = vcombine.high %v211, %v211
    %v228 = vcombine.high %v218, %v218
    %v229 = vcombine.high %v225, %v225
    %v366 = vunpack.c.l.b16 %v52
    %v367 = vunpack.c.h.b16 %v52
    %v368 = vunpack.c.l.b16 %v53
    %v369 = vunpack.c.h.b16 %v53
    %v370 = vunpack.c.l.b16 %v54
    %v371 = vunpack.c.h.b16 %v54
    %v372 = vunpack.c.l.b16 %v55
    %v373 = vunpack.c.h.b16 %v55
    %v374 = vunpack.c.l.b16 %v56
    %v375 = vunpack.c.h.b16 %v56
    %v376 = vunpack.c.l.b16 %v57
    %v377 = vunpack.c.h.b16 %v57
    %v378 = vunpack.c.l.b16 %v58
    %v379 = vunpack.c.h.b16 %v58
    %v380 = vunpack.c.l.b16 %v59
    %v381 = vunpack.c.h.b16 %v59
    %v382 = vunpack.c.l.b16 %v60
    %v383 = vunpack.c.h.b16 %v60
    %v384 = vunpack.c.l.b16 %v61
    %v385 = vunpack.c.h.b16 %v61
    %v386 = vunpack.c.l.b16 %v62
    %v387 = vunpack.c.h.b16 %v62
    %v388 = vunpack.c.l.b16 %v63
    %v389 = vunpack.c.h.b16 %v63
    %v390 = vunpack.c.l.b16 %v64
    %v391 = vunpack.c.h.b16 %v64
    %v392 = vunpack.c.l.b16 %v65
    %v393 = vunpack.c.h.b16 %v65
    %v394 = vunpack.c.l.b16 %v66
    %v395 = vunpack.c.h.b16 %v66
    %v396 = vunpack.c.l.b16 %v67
    %v397 = vunpack.c.h.b16 %v67
    %v398 = vunpack.c.l.b16 %v68
    %v399 = vunpack.c.h.b16 %v68
    %v400 = vunpack.c.l.b16 %v69
    %v401 = vunpack.c.h.b16 %v69
    %v402 = vunpack.c.l.b16 %v70
    %v403 = vunpack.c.h.b16 %v70
    %v404 = vunpack.c.l.b16 %v71
    %v405 = vunpack.c.h.b16 %v71
    %v406 = vunpack.c.l.b16 %v72
    %v407 = vunpack.c.h.b16 %v72
    %v408 = vunpack.c.l.b16 %v73
    %v409 = vunpack.c.h.b16 %v73
    %v410 = vunpack.c.l.b16 %v74
    %v411 = vunpack.c.h.b16 %v74
    %v412 = vunpack.c.l.b16 %v75
    %v413 = vunpack.c.h.b16 %v75
    %v414 = vunpack.c.l.b16 %v76
    %v415 = vunpack.c.h.b16 %v76
    %v416 = vunpack.c.l.b16 %v77
    %v417 = vunpack.c.h.b16 %v77
    %v418 = vunpack.c.l.b16 %v78
    %v419 = vunpack.c.h.b16 %v78
    %v420 = vunpack.c.l.b16 %v79
    %v421 = vunpack.c.h.b16 %v79
    %v422 = vunpack.c.l.b16 %v80
    %v423 = vunpack.c.h.b16 %v80
    %v424 = vunpack.c.l.b16 %v81
    %v425 = vunpack.c.h.b16 %v81
    %v426 = vunpack.c.l.b16 %v82
    %v427 = vunpack.c.h.b16 %v82
    %v428 = vunpack.c.l.b16 %v83
    %v429 = vunpack.c.h.b16 %v83
    %v430 = vunpack.c.l.b16 %v84
    %v431 = vunpack.c.h.b16 %v84
    %v432 = vunpack.c.l.b16 %v85
    %v433 = vunpack.c.h.b16 %v85
    %v434 = vunpack.c.l.b16 %v86
    %v435 = vunpack.c.h.b16 %v86
    %v436 = vunpack.c.l.b16 %v87
    %v437 = vunpack.c.h.b16 %v87
    %v438 = vunpack.c.l.b16 %v88
    %v439 = vunpack.c.h.b16 %v88
    %v440 = vunpack.c.l.b16 %v89
    %v441 = vunpack.c.h.b16 %v89
    %v442 = vunpack.c.l.b16 %v90
    %v443 = vunpack.c.h.b16 %v90
    %v444 = vunpack.c.l.b16 %v91
    %v445 = vunpack.c.h.b16 %v91
    %v446 = vunpack.c.l.b16 %v92
    %v447 = vunpack.c.h.b16 %v92
    %v448 = vunpack.c.l.b16 %v93
    %v449 = vunpack.c.h.b16 %v93
    %v450 = vunpack.c.l.b16 %v94
    %v451 = vunpack.c.h.b16 %v94
    %v452 = vunpack.c.l.b16 %v95
    %v453 = vunpack.c.h.b16 %v95
    %v454 = vunpack.c.l.b16 %v96
    %v455 = vunpack.c.h.b16 %v96
    %v456 = vunpack.c.l.b16 %v97
    %v457 = vunpack.c.h.b16 %v97
    %v458 = vunpack.c.l.b16 %v98
    %v459 = vunpack.c.h.b16 %v98
    %v460 = vunpack.c.l.b16 %v99
    %v461 = vunpack.c.h.b16 %v99
    %v462 = vunpack.c.l.b16 %v100
    %v463 = vunpack.c.h.b16 %v100
    %v464 = vunpack.c.l.b16 %v101
    %v465 = vunpack.c.h.b16 %v101
    %v466 = vunpack.c.l.b16 %v102
    %v467 = vunpack.c.h.b16 %v102
    %v468 = vunpack.c.l.b16 %v103
    %v469 = vunpack.c.h.b16 %v103
    %v470 = vunpack.c.l.b16 %v104
    %v471 = vunpack.c.h.b16 %v104
    %v472 = vunpack.c.l.b16 %v105
    %v473 = vunpack.c.h.b16 %v105
    %v474 = vunpack.c.l.b16 %v106
    %v475 = vunpack.c.h.b16 %v106
    %v476 = vunpack.c.l.b16 %v107
    %v477 = vunpack.c.h.b16 %v107
    %v478 = vunpack.c.l.b16 %v108
    %v479 = vunpack.c.h.b16 %v108
    %v480 = vunpack.c.l.b16 %v109
    %v481 = vunpack.c.h.b16 %v109
    %v482 = vunpack.c.l.b16 %v110
    %v483 = vunpack.c.h.b16 %v110
    %v484 = vunpack.c.l.b16 %v111
    %v485 = vunpack.c.h.b16 %v111
    %v486 = vunpack.c.l.b16 %v112
    %v487 = vunpack.c.h.b16 %v112
    %v488 = vunpack.c.l.b16 %v113
    %v489 = vunpack.c.h.b16 %v113
    %v490 = vunpack.c.l.b16 %v114
    %v491 = vunpack.c.h.b16 %v114
    %v492 = vunpack.c.l.b16 %v115
    %v493 = vunpack.c.h.b16 %v115
    %v494 = vunpack.c.l.b16 %v116
    %v495 = vunpack.c.h.b16 %v116
    %v496 = vunpack.c.l.b16 %v117
    %v497 = vunpack.c.h.b16 %v117
    %v498 = vunpack.c.l.b16 %v118
    %v499 = vunpack.c.h.b16 %v118
    %v500 = vunpack.c.l.b16 %v119
    %v501 = vunpack.c.h.b16 %v119
    %v502 = vunpack.c.l.b16 %v120
    %v503 = vunpack.c.h.b16 %v120
    %v504 = vunpack.c.l.b16 %v121
    %v505 = vunpack.c.h.b16 %v121
    %v506 = vunpack.c.l.b16 %v122
    %v507 = vunpack.c.h.b16 %v122
    %v508 = vunpack.c.l.b16 %v123
    %v509 = vunpack.c.h.b16 %v123
    %v510 = vunpack.c.l.b16 %v124
    %v511 = vunpack.c.h.b16 %v124
    %v512 = vunpack.c.l.b16 %v125
    %v513 = vunpack.c.h.b16 %v125
    %v514 = vunpack.c.l.b16 %v126
    %v515 = vunpack.c.h.b16 %v126
    %v516 = vunpack.c.l.b16 %v127
    %v517 = vunpack.c.h.b16 %v127
    %v518 = vunpack.c.l.b16 %v128
    %v519 = vunpack.c.h.b16 %v128
    %v520 = vunpack.c.l.b16 %v129
    %v521 = vunpack.c.h.b16 %v129
    %v522 = vunpack.c.l.b16 %v130
    %v523 = vunpack.c.h.b16 %v130
    %v524 = vunpack.c.l.b16 %v131
    %v525 = vunpack.c.h.b16 %v131
    %v526 = vunpack.c.l.b16 %v132
    %v527 = vunpack.c.h.b16 %v132
    %v528 = vunpack.c.l.b16 %v133
    %v529 = vunpack.c.h.b16 %v133
    %v530 = vunpack.c.l.b16 %v134
    %v531 = vunpack.c.h.b16 %v134
    %v532 = vunpack.c.l.b16 %v135
    %v533 = vunpack.c.h.b16 %v135
    %v534 = vunpack.c.l.b16 %v136
    %v535 = vunpack.c.h.b16 %v136
    %v536 = vunpack.c.l.b16 %v137
    %v537 = vunpack.c.h.b16 %v137
    %v538 = vunpack.c.l.b16 %v138
    %v539 = vunpack.c.h.b16 %v138
    %v540 = vunpack.c.l.b16 %v139
    %v541 = vunpack.c.h.b16 %v139
    %v542 = vunpack.c.l.b16 %v140
    %v543 = vunpack.c.h.b16 %v140
    %v544 = vunpack.c.l.b16 %v141
    %v545 = vunpack.c.h.b16 %v141
    %v546 = vunpack.c.l.b16 %v142
    %v547 = vunpack.c.h.b16 %v142
    %v548 = vunpack.c.l.b16 %v143
    %v549 = vunpack.c.h.b16 %v143
    %v550 = vunpack.c.l.b16 %v144
    %v551 = vunpack.c.h.b16 %v144
    %v552 = vunpack.c.l.b16 %v145
    %v553 = vunpack.c.h.b16 %v145
    %v554 = vunpack.c.l.b16 %v146
    %v555 = vunpack.c.h.b16 %v146
    %v556 = vunpack.c.l.b16 %v147
    %v557 = vunpack.c.h.b16 %v147
    %v558 = vunpack.c.l.b16 %v148
    %v559 = vunpack.c.h.b16 %v148
    %v560 = vunpack.c.l.b16 %v149
    %v561 = vunpack.c.h.b16 %v149
    %v562 = vunpack.c.l.b16 %v150
    %v563 = vunpack.c.h.b16 %v150
    %v564 = vunpack.c.l.b16 %v151
    %v565 = vunpack.c.h.b16 %v151
    %v566 = vunpack.c.l.b16 %v152
    %v567 = vunpack.c.h.b16 %v152
    %v568 = vunpack.c.l.b16 %v153
    %v569 = vunpack.c.h.b16 %v153
    %v570 = vunpack.c.l.b16 %v154
    %v571 = vunpack.c.h.b16 %v154
    %v572 = vunpack.c.l.b16 %v155
    %v573 = vunpack.c.h.b16 %v155
    %v574 = vunpack.c.l.b16 %v156
    %v575 = vunpack.c.h.b16 %v156
    %v576 = vunpack.c.l.b16 %v157
    %v577 = vunpack.c.h.b16 %v157
    %v578 = vunpack.c.l.b16 %v158
    %v579 = vunpack.c.h.b16 %v158
    %v580 = vunpack.c.l.b16 %v159
    %v581 = vunpack.c.h.b16 %v159
    %v582 = vunpack.c.l.b16 %v160
    %v583 = vunpack.c.h.b16 %v160
    %v584 = vunpack.c.l.b16 %v161
    %v585 = vunpack.c.h.b16 %v161
    %v586 = vunpack.c.l.b16 %v162
    %v587 = vunpack.c.h.b16 %v162
    %v588 = vunpack.c.l.b16 %v163
    %v589 = vunpack.c.h.b16 %v163
    %v590 = vunpack.c.l.b16 %v164
    %v591 = vunpack.c.h.b16 %v164
    %v592 = vunpack.c.l.b16 %v165
    %v593 = vunpack.c.h.b16 %v165
    %v594 = vunpack.c.l.b16 %v166
    %v595 = vunpack.c.h.b16 %v166
    %v596 = vunpack.c.l.b16 %v167
    %v597 = vunpack.c.h.b16 %v167
    %v598 = vunpack.c.l.b16 %v168
    %v599 = vunpack.c.h.b16 %v168
    %v600 = vunpack.c.l.b16 %v169
    %v601 = vunpack.c.h.b16 %v169
    %v602 = vunpack.c.l.b16 %v170
    %v603 = vunpack.c.h.b16 %v170
    %v604 = vunpack.c.l.b16 %v171
    %v605 = vunpack.c.h.b16 %v171
    %v606 = vunpack.c.l.b16 %v172
    %v607 = vunpack.c.h.b16 %v172
    %v608 = vunpack.c.l.b16 %v173
    %v609 = vunpack.c.h.b16 %v173
    %v610 = vunpack.c.l.b16 %v174
    %v611 = vunpack.c.h.b16 %v174
    %v612 = vunpack.c.l.b16 %v175
    %v613 = vunpack.c.h.b16 %v175
    %v614 = vunpack.c.l.b16 %v176
    %v615 = vunpack.c.h.b16 %v176
    %v616 = vunpack.c.l.b16 %v177
    %v617 = vunpack.c.h.b16 %v177
    %v618 = vunpack.c.l.b16 %v178
    %v619 = vunpack.c.h.b16 %v178
    %v620 = vunpack.c.l.b16 %v179
    %v621 = vunpack.c.h.b16 %v179
    %v622 = vpack.c.b16 %v368, %v366
    %v623 = vpack.c.b16 %v369, %v367
    %v624 = vpack.c.b16 %v372, %v370
    %v625 = vpack.c.b16 %v373, %v371
    %v626 = vpack.c.b16 %v376, %v374
    %v627 = vpack.c.b16 %v377, %v375
    %v628 = vpack.c.b16 %v380, %v378
    %v629 = vpack.c.b16 %v381, %v379
    %v630 = vpack.c.b16 %v384, %v382
    %v631 = vpack.c.b16 %v385, %v383
    %v632 = vpack.c.b16 %v388, %v386
    %v633 = vpack.c.b16 %v389, %v387
    %v634 = vpack.c.b16 %v392, %v390
    %v635 = vpack.c.b16 %v393, %v391
    %v636 = vpack.c.b16 %v396, %v394
    %v637 = vpack.c.b16 %v397, %v395
    %v638 = vpack.c.b16 %v400, %v398
    %v639 = vpack.c.b16 %v401, %v399
    %v640 = vpack.c.b16 %v404, %v402
    %v641 = vpack.c.b16 %v405, %v403
    %v642 = vpack.c.b16 %v408, %v406
    %v643 = vpack.c.b16 %v409, %v407
    %v644 = vpack.c.b16 %v412, %v410
    %v645 = vpack.c.b16 %v413, %v411
    %v646 = vpack.c.b16 %v416, %v414
    %v647 = vpack.c.b16 %v417, %v415
    %v648 = vpack.c.b16 %v420, %v418
    %v649 = vpack.c.b16 %v421, %v419
    %v650 = vpack.c.b16 %v424, %v422
    %v651 = vpack.c.b16 %v425, %v423
    %v652 = vpack.c.b16 %v428, %v426
    %v653 = vpack.c.b16 %v429, %v427
    %v654 = vpack.c.b16 %v432, %v430
    %v655 = vpack.c.b16 %v433, %v431
    %v656 = vpack.c.b16 %v436, %v434
    %v657 = vpack.c.b16 %v437, %v435
    %v658 = vpack.c.b16 %v440, %v438
    %v659 = vpack.c.b16 %v441, %v439
    %v660 = vpack.c.b16 %v444, %v442
    %v661 = vpack.c.b16 %v445, %v443
    %v662 = vpack.c.b16 %v448, %v446
    %v663 = vpack.c.b16 %v449, %v447
    %v664 = vpack.c.b16 %v452, %v450
    %v665 = vpack.c.b16 %v453, %v451
    %v666 = vpack.c.b16 %v456, %v454
    %v667 = vpack.c.b16 %v457, %v455
    %v668 = vpack.c.b16 %v460, %v458
    %v669 = vpack.c.b16 %v461, %v459
    %v670 = vpack.c.b16 %v464, %v462
    %v671 = vpack.c.b16 %v465, %v463
    %v672 = vpack.c.b16 %v468, %v466
    %v673 = vpack.c.b16 %v469, %v467
    %v674 = vpack.c.b16 %v472, %v470
    %v675 = vpack.c.b16 %v473, %v471
    %v676 = vpack.c.b16 %v476, %v474
    %v677 = vpack.c.b16 %v477, %v475
    %v678 = vpack.c.b16 %v480, %v478
    %v679 = vpack.c.b16 %v481, %v479
    %v680 = vpack.c.b16 %v484, %v482
    %v681 = vpack.c.b16 %v485, %v483
    %v682 = vpack.c.b16 %v488, %v486
    %v683 = vpack.c.b16 %v489, %v487
    %v684 = vpack.c.b16 %v492, %v490
    %v685 = vpack.c.b16 %v493, %v491
    %v686 = vpack.c.b16 %v496, %v494
    %v687 = vpack.c.b16 %v497, %v495
    %v688 = vpack.c.b16 %v500, %v498
    %v689 = vpack.c.b16 %v501, %v499
    %v690 = vpack.c.b16 %v504, %v502
    %v691 = vpack.c.b16 %v505, %v503
    %v692 = vpack.c.b16 %v508, %v506
    %v693 = vpack.c.b16 %v509, %v507
    %v694 = vpack.c.b16 %v512, %v510
    %v695 = vpack.c.b16 %v513, %v511
    %v696 = vpack.c.b16 %v516, %v514
    %v697 = vpack.c.b16 %v517, %v515
    %v698 = vpack.c.b16 %v520, %v518
    %v699 = vpack.c.b16 %v521, %v519
    %v700 = vpack.c.b16 %v524, %v522
    %v701 = vpack.c.b16 %v525, %v523
    %v702 = vpack.c.b16 %v528, %v526
    %v703 = vpack.c.b16 %v529, %v527
    %v704 = vpack.c.b16 %v532, %v530
    %v705 = vpack.c.b16 %v533, %v531
    %v706 = vpack.c.b16 %v536, %v534
    %v707 = vpack.c.b16 %v537, %v535
    %v708 = vpack.c.b16 %v540, %v538
    %v709 = vpack.c.b16 %v541, %v539
    %v710 = vpack.c.b16 %v544, %v542
    %v711 = vpack.c.b16 %v545, %v543
    %v712 = vpack.c.b16 %v548, %v546
    %v713 = vpack.c.b16 %v549, %v547
    %v714 = vpack.c.b16 %v552, %v550
    %v715 = vpack.c.b16 %v553, %v551
    %v716 = vpack.c.b16 %v556, %v554
    %v717 = vpack.c.b16 %v557, %v555
    %v718 = vpack.c.b16 %v560, %v558
    %v719 = vpack.c.b16 %v561, %v559
    %v720 = vpack.c.b16 %v564, %v562
    %v721 = vpack.c.b16 %v565, %v563
    %v722 = vpack.c.b16 %v568, %v566
    %v723 = vpack.c.b16 %v569, %v567
    %v724 = vpack.c.b16 %v572, %v570
    %v725 = vpack.c.b16 %v573, %v571
    %v726 = vpack.c.b16 %v576, %v574
    %v727 = vpack.c.b16 %v577, %v575
    %v728 = vpack.c.b16 %v580, %v578
    %v729 = vpack.c.b16 %v581, %v579
    %v730 = vpack.c.b16 %v584, %v582
    %v731 = vpack.c.b16 %v585, %v583
    %v732 = vpack.c.b16 %v588, %v586
    %v733 = vpack.c.b16 %v589, %v587
    %v734 = vpack.c.b16 %v592, %v590
    %v735 = vpack.c.b16 %v593, %v591
    %v736 = vpack.c.b16 %v596, %v594
    %v737 = vpack.c.b16 %v597, %v595
    %v738 = vpack.c.b16 %v600, %v598
    %v739 = vpack.c.b16 %v601, %v599
    %v740 = vpack.c.b16 %v604, %v602
    %v741 = vpack.c.b16 %v605, %v603
    %v742 = vpack.c.b16 %v608, %v606
    %v743 = vpack.c.b16 %v609, %v607
    %v744 = vpack.c.b16 %v612, %v610
    %v745 = vpack.c.b16 %v613, %v611
    %v746 = vpack.c.b16 %v616, %v614
    %v747 = vpack.c.b16 %v617, %v615
    %v748 = vpack.c.b16 %v620, %v618
    %v749 = vpack.c.b16 %v621, %v619
    %878 = vmatprep.subr.bf16.mxu0 %v623
    %879 = vmatpush1.bf16.msra.mxu0 %v622
    %880 = vmatprep.subr.bf16.mxu0 %v625
    %881 = vmatpush1.bf16.msra.mxu0 %v624
    %882 = vmatprep.subr.bf16.mxu0 %v627
    %883 = vmatpush1.bf16.msra.mxu0 %v626
    %884 = vmatprep.subr.bf16.mxu0 %v629
    %885 = vmatpush1.bf16.msra.mxu0 %v628
    %886 = vmatprep.subr.bf16.mxu0 %v631
    %887 = vmatpush1.bf16.msra.mxu0 %v630
    %888 = vmatprep.subr.bf16.mxu0 %v633
    %889 = vmatpush1.bf16.msra.mxu0 %v632
    %890 = vmatprep.subr.bf16.mxu0 %v635
    %891 = vmatpush1.bf16.msra.mxu0 %v634
    %892 = vmatprep.subr.bf16.mxu0 %v637
    %893 = vmatpush1.bf16.msra.mxu0 %v636
    %894 = vmatprep.subr.bf16.mxu0 %v639
    %895 = vmatpush1.bf16.msra.mxu0 %v638
    %896 = vmatprep.subr.bf16.mxu0 %v641
    %897 = vmatpush1.bf16.msra.mxu0 %v640
    %898 = vmatprep.subr.bf16.mxu0 %v643
    %899 = vmatpush1.bf16.msra.mxu0 %v642
    %900 = vmatprep.subr.bf16.mxu0 %v645
    %901 = vmatpush1.bf16.msra.mxu0 %v644
    %902 = vmatprep.subr.bf16.mxu0 %v647
    %903 = vmatpush1.bf16.msra.mxu0 %v646
    %904 = vmatprep.subr.bf16.mxu0 %v649
    %905 = vmatpush1.bf16.msra.mxu0 %v648
    %906 = vmatprep.subr.bf16.mxu0 %v651
    %907 = vmatpush1.bf16.msra.mxu0 %v650
    %908 = vmatprep.subr.bf16.mxu0 %v653
    %909 = vmatpush1.bf16.msra.mxu0 %v652
    %910 = vmatprep.mubr.bf16.mxu0 %v218
    %911 = vmatmul.mubr.bf16.gmra.mrb[0].mxu0 %v204
    %v912 = vpop.f32.mrb[0].mxu0
    %v913 = vadd.f32 0.0, %v912
    %v914 = vpop.f32.mrb[0].mxu0
    %v915 = vadd.f32 0.0, %v914
    %v916 = vpop.f32.mrb[0].mxu0
    %v917 = vpop.f32.mrb[0].mxu0
    %918 = vdwg.mxu0
    %919 = vmatprep.subr.bf16.mxu0 %v655
    %920 = vmatpush1.bf16.msra.mxu0 %v654
    %921 = vmatprep.subr.bf16.mxu0 %v657
    %922 = vmatpush1.bf16.msra.mxu0 %v656
    %923 = vmatprep.subr.bf16.mxu0 %v659
    %924 = vmatpush1.bf16.msra.mxu0 %v658
    %925 = vmatprep.subr.bf16.mxu0 %v661
    %926 = vmatpush1.bf16.msra.mxu0 %v660
    %927 = vmatprep.subr.bf16.mxu0 %v663
    %928 = vmatpush1.bf16.msra.mxu0 %v662
    %929 = vmatprep.subr.bf16.mxu0 %v665
    %930 = vmatpush1.bf16.msra.mxu0 %v664
    %931 = vmatprep.subr.bf16.mxu0 %v667
    %932 = vmatpush1.bf16.msra.mxu0 %v666
    %933 = vmatprep.subr.bf16.mxu0 %v669
    %934 = vmatpush1.bf16.msra.mxu0 %v668
    %935 = vmatprep.subr.bf16.mxu0 %v671
    %936 = vmatpush1.bf16.msra.mxu0 %v670
    %937 = vmatprep.subr.bf16.mxu0 %v673
    %938 = vmatpush1.bf16.msra.mxu0 %v672
    %939 = vmatprep.subr.bf16.mxu0 %v675
    %940 = vmatpush1.bf16.msra.mxu0 %v674
    %941 = vmatprep.subr.bf16.mxu0 %v677
    %942 = vmatpush1.bf16.msra.mxu0 %v676
    %943 = vmatprep.subr.bf16.mxu0 %v679
    %944 = vmatpush1.bf16.msra.mxu0 %v678
    %945 = vmatprep.subr.bf16.mxu0 %v681
    %946 = vmatpush1.bf16.msra.mxu0 %v680
    %947 = vmatprep.subr.bf16.mxu0 %v683
    %948 = vmatpush1.bf16.msra.mxu0 %v682
    %949 = vmatprep.subr.bf16.mxu0 %v685
    %950 = vmatpush1.bf16.msra.mxu0 %v684
    %951 = vmatprep.mubr.bf16.mxu0 %v228
    %952 = vmatmul.mubr.bf16.gmra.mrb[0].mxu0 %v226
    %v953 = vpop.f32.mrb[0].mxu0
    %v954 = vadd.f32 %v913, %v953
    %v955 = vpop.f32.mrb[0].mxu0
    %v956 = vadd.f32 %v915, %v955
    %v957 = vpop.f32.mrb[0].mxu0
    %v958 = vpop.f32.mrb[0].mxu0
    %959 = vdwg.mxu0
    %960 = vmatprep.subr.bf16.mxu0 %v687
    %961 = vmatpush1.bf16.msra.mxu0 %v686
    %962 = vmatprep.subr.bf16.mxu0 %v689
    %963 = vmatpush1.bf16.msra.mxu0 %v688
    %964 = vmatprep.subr.bf16.mxu0 %v691
    %965 = vmatpush1.bf16.msra.mxu0 %v690
    %966 = vmatprep.subr.bf16.mxu0 %v693
    %967 = vmatpush1.bf16.msra.mxu0 %v692
    %968 = vmatprep.subr.bf16.mxu0 %v695
    %969 = vmatpush1.bf16.msra.mxu0 %v694
    %970 = vmatprep.subr.bf16.mxu0 %v697
    %971 = vmatpush1.bf16.msra.mxu0 %v696
    %972 = vmatprep.subr.bf16.mxu0 %v699
    %973 = vmatpush1.bf16.msra.mxu0 %v698
    %974 = vmatprep.subr.bf16.mxu0 %v701
    %975 = vmatpush1.bf16.msra.mxu0 %v700
    %976 = vmatprep.subr.bf16.mxu0 %v703
    %977 = vmatpush1.bf16.msra.mxu0 %v702
    %978 = vmatprep.subr.bf16.mxu0 %v705
    %979 = vmatpush1.bf16.msra.mxu0 %v704
    %980 = vmatprep.subr.bf16.mxu0 %v707
    %981 = vmatpush1.bf16.msra.mxu0 %v706
    %982 = vmatprep.subr.bf16.mxu0 %v709
    %983 = vmatpush1.bf16.msra.mxu0 %v708
    %984 = vmatprep.subr.bf16.mxu0 %v711
    %985 = vmatpush1.bf16.msra.mxu0 %v710
    %986 = vmatprep.subr.bf16.mxu0 %v713
    %987 = vmatpush1.bf16.msra.mxu0 %v712
    %988 = vmatprep.subr.bf16.mxu0 %v715
    %989 = vmatpush1.bf16.msra.mxu0 %v714
    %990 = vmatprep.subr.bf16.mxu0 %v717
    %991 = vmatpush1.bf16.msra.mxu0 %v716
    %992 = vmatprep.mubr.bf16.mxu0 %v225
    %993 = vmatmul.mubr.bf16.gmra.mrb[0].mxu0 %v211
    %v994 = vpop.f32.mrb[0].mxu0
    %v995 = vadd.f32 %v954, %v994
    %v996 = vpop.f32.mrb[0].mxu0
    %v997 = vadd.f32 %v956, %v996
    %v998 = vpop.f32.mrb[0].mxu0
    %v999 = vpop.f32.mrb[0].mxu0
    %1000 = vdwg.mxu0
    %1001 = vmatprep.subr.bf16.mxu0 %v719
    %1002 = vmatpush1.bf16.msra.mxu0 %v718
    %1003 = vmatprep.subr.bf16.mxu0 %v721
    %1004 = vmatpush1.bf16.msra.mxu0 %v720
    %1005 = vmatprep.subr.bf16.mxu0 %v723
    %1006 = vmatpush1.bf16.msra.mxu0 %v722
    %1007 = vmatprep.subr.bf16.mxu0 %v725
    %1008 = vmatpush1.bf16.msra.mxu0 %v724
    %1009 = vmatprep.subr.bf16.mxu0 %v727
    %1010 = vmatpush1.bf16.msra.mxu0 %v726
    %1011 = vmatprep.subr.bf16.mxu0 %v729
    %1012 = vmatpush1.bf16.msra.mxu0 %v728
    %1013 = vmatprep.subr.bf16.mxu0 %v731
    %1014 = vmatpush1.bf16.msra.mxu0 %v730
    %1015 = vmatprep.subr.bf16.mxu0 %v733
    %1016 = vmatpush1.bf16.msra.mxu0 %v732
    %1017 = vmatprep.subr.bf16.mxu0 %v735
    %1018 = vmatpush1.bf16.msra.mxu0 %v734
    %1019 = vmatprep.subr.bf16.mxu0 %v737
    %1020 = vmatpush1.bf16.msra.mxu0 %v736
    %1021 = vmatprep.subr.bf16.mxu0 %v739
    %1022 = vmatpush1.bf16.msra.mxu0 %v738
    %1023 = vmatprep.subr.bf16.mxu0 %v741
    %1024 = vmatpush1.bf16.msra.mxu0 %v740
    %1025 = vmatprep.subr.bf16.mxu0 %v743
    %1026 = vmatpush1.bf16.msra.mxu0 %v742
    %1027 = vmatprep.subr.bf16.mxu0 %v745
    %1028 = vmatpush1.bf16.msra.mxu0 %v744
    %1029 = vmatprep.subr.bf16.mxu0 %v747
    %1030 = vmatpush1.bf16.msra.mxu0 %v746
    %1031 = vmatprep.subr.bf16.mxu0 %v749
    %1032 = vmatpush1.bf16.msra.mxu0 %v748
    %1033 = vmatprep.mubr.bf16.mxu0 %v229
    %1034 = vmatmul.mubr.bf16.gmra.mrb[0].mxu0 %v227
    %v1035 = vpop.f32.mrb[0].mxu0
    %v1036 = vadd.f32 %v995, %v1035
    %v1037 = vpop.f32.mrb[0].mxu0
    %v1038 = vadd.f32 %v997, %v1037
    %v1039 = vpop.f32.mrb[0].mxu0
    %v1040 = vpop.f32.mrb[0].mxu0
    %1041 = vdwg.mxu0
    %v1044 = vcombine.low %v1036, %v1038
    %v1046 = vunpack.c.l.s4 1983009808
    %v1047 = vunpack.c.0.s8 %v1046
    %v1048 = vlaneseq
    %v1049 = vshrl.u32 %v1048, 7
    %v1050 = vsub.s32 %v1047, %v1049
    %v1051 = vrot.slane %v1044, %v1050
    %v1053 = vadd.f32 %v51, %v1051
    %1054 = vst [vmem:[#allocation2] sm:$0xf] %v1053
    // Predicated region
    $region26: #{tpu_custom_call.1} parent=1 // pred_check
      %p1055 = pneg %p41
    $region27: #{tpu_custom_call.1} parent=1 // pred_check_branch
      %1057 = sbr.rel (%p1055) target = $region29
    $region28: #{tpu_custom_call.1} parent=1 // pred_region
      %s1058 = smul.u32 0, 256
      %s1059 = sshra.s32 %s1058, 7
      %s1060 = sand.u32 %s1058, 127
      %s1061 = scalar_lea.vmem %s2, %s1059
      %v1062 = vld [vmem:[%s1061] sm:$0x3]
      %v1063 = vld [vmem:[#allocation2] sm:$0xf]
      %v1065 = vlaneseq
      %v1066 = vshrl.u32 %v1065, 7
      %v1067 = vsub.s32 0, %v1066
      %v1068 = vrot.slane %v1062, %v1067
      %v1069 = vlaneseq
      %v1070 = vshrl.u32 %v1069, 7
      %v1071 = vsub.s32 1, %v1070
      %v1072 = vrot.slane %v1062, %v1071
      %v1073 = vcombine.low %v1068, %v1072
      %v1075 = vunpack.c.l.s4 1983009808
      %v1076 = vunpack.c.0.s8 %v1075
      %v1077 = vlaneseq
      %v1078 = vshrl.u32 %v1077, 7
      %v1079 = vsub.s32 %v1076, %v1078
      %v1080 = vrot.slane %v1073, %v1079
      %v1082 = vadd.f32 %v1063, %v1080
      %v1083 = vmax.f32 %v1082, 0.0
      %v1086 = vunpack.c.l.s4 1983009808
      %v1087 = vunpack.c.0.s8 %v1086
      %v1088 = vlaneseq
      %v1089 = vshrl.u32 %v1088, 7
      %v1090 = vsub.s32 %v1087, %v1089
      %v1091 = vrot.slane %v1083, %v1090
      %v1092 = vcombine.high %v1091, %v1091
      %v1095 = vpack.c.bf16 %v1091, %v1091
      %v1096 = vpack.c.bf16 %v1092, %v1092
      %v1099 = vcombine.low %v1095, %v1096
      %v1101 = vunpack.c.l.s4 1966171168
      %v1102 = vunpack.c.0.s8 %v1101
      %v1103 = vlaneseq
      %v1104 = vshrl.u32 %v1103, 7
      %v1105 = vsub.s32 %v1102, %v1104
      %v1106 = vrot.slane %v1099, %v1105
      %v1108 = vunpack.c.l.s4 1966171168
      %v1109 = vunpack.c.0.s8 %v1108
      %v1110 = vlaneseq
      %v1111 = vshrl.u32 %v1110, 7
      %v1112 = vsub.s32 %v1109, %v1111
      %v1113 = vrot.slane %v1106, %v1112
      %1115 = vst [vmem:[#allocation8] sm:$0x3] %v1113
    $region29: #{tpu_custom_call.1} parent=1 // pred_fallthru
      _
    // Predicated region
    $region30: #{tpu_custom_call.1} parent=1 // pred_check
      _
    $region31: #{tpu_custom_call.1} parent=1 // pred_check_branch
      %1117 = sbr.rel (0) target = $region33
    $region32: #{tpu_custom_call.1} parent=1 // pred_region
      %s1119 = ssub.s32 32, 32
      %1120 = vsyncadd [#allocation5], %s1119
      %s1122 = sshll.u32 [#allocation8], 4
      %s1123 = int_to_ptr.vmem [resolvable:$true] %s1122
      %1125 = dma.vmem_to_hbm [thread:$0]  %s1123, 32, %s3, [#allocation5]
    $region33: #{tpu_custom_call.1} parent=1 // pred_fallthru
      _
    // Predicated region
    $region34: #{tpu_custom_call.1} parent=1 // pred_check
      _
    $region35: #{tpu_custom_call.1} parent=1 // pred_check_branch
      %1127 = sbr.rel (0) target = $region37
    $region36: #{tpu_custom_call.1} parent=1 // pred_region
      %1128 = dma.done [#allocation5], 32
    $region37: #{tpu_custom_call.1} parent=1 // pred_fallthru
      _
    %1129 = vsyncpa [#allocation4], 1
    %1130 = vsyncpa [#allocation7], 1
    %1131 = vsyncpa [#allocation5], 1

</llo_original>
